<compile_context>
chip_gen: v5e
topology: v5e:2x2
jax: 0.10.0
libtpu: 0.0.40
codegen_flags: <defaults>
</compile_context>

<pallas_src>
import functools

import jax
import jax.numpy as jnp
from jax import lax
from jax.experimental import pallas as pl
from jax.experimental.pallas import tpu as pltpu

LANES = 128
_PAD_LOGIT = 40.0   # sigmoid(40) == 1.0 exactly in f32 -> diff == 0 -> loss == 0
_PAD_LABEL = 1.0
_TEMP_SLOTS = 10            # conservative count of live (rows, 128) f32 temps
_VMEM_BUDGET = 48 << 20     # keep comfortably under v7x's 64 MiB physical VMEM


def _focal_partial_sum_kernel(logits_ref, label_ref, out_ref, *,
                              alpha, gamma, tile_rows, part_rows, m_rows):
    def block_loss():
        x = logits_ref[...].astype(jnp.float32)
        y = label_ref[...].astype(jnp.float32)

        # Fused, numerically stable chain (3 EUP transcendentals, no divide):
        #   e                 = exp(-|x|)
        #   log(sigmoid(x))   = min(x, 0)  - log1p(e)
        #   log(1-sigmoid(x)) = min(-x, 0) - log1p(e)
        #   sigmoid(x)        = exp(log(sigmoid(x)))     (EUP, replaces VPU divide)
        e = jnp.exp(-jnp.abs(x))
        log1p_e = jnp.log1p(e)
        log_probs = jnp.minimum(x, 0.0) - log1p_e
        log_1_probs = jnp.minimum(-x, 0.0) - log1p_e
        probs = jnp.exp(log_probs)

        diff = jnp.abs(y - probs)
        if float(gamma) == int(gamma):
            # Integral gamma (default 2): multiply chain on the VPU, no exp/log.
            coeff = -lax.integer_pow(diff, int(gamma))
        else:
            coeff = -(diff ** jnp.float32(gamma))

        ce = alpha * y * log_probs + (1.0 - alpha) * (1.0 - y) * log_1_probs
        return ce * coeff

    def partial_sum(loss):
        # Lane-parallel (part_rows, 128) partial sum: independent vector-add
        # chains; the single cross-lane reduce happens once in XLA.
        return jnp.sum(loss.reshape(tile_rows // part_rows, part_rows, LANES),
                       axis=0)

    if m_rows % tile_rows == 0:
        # Grid tiles the data exactly: no masking anywhere.
        out_ref[...] = partial_sum(block_loss())
    else:
        # Only the final (partial) block pays for the row mask.
        is_last = pl.program_id(0) == pl.num_programs(0) - 1

        @pl.when(jnp.logical_not(is_last))
        def _():
            out_ref[...] = partial_sum(block_loss())

        @pl.when(is_last)
        def _():
            row = lax.broadcasted_iota(jnp.int32, (tile_rows, LANES), 0)
            valid = (pl.program_id(0) * tile_rows + row) < m_rows
            out_ref[...] = partial_sum(jnp.where(valid, block_loss(), 0.0))


def focal_loss_v2(logits, label, alpha=0.25, gamma=2.0, reduction="mean",
                  tile_rows=4096, compact_labels=True):
    """JAX/Pallas equivalent of FocalLossV2.forward (forward pass only)."""
    total = logits.size
    flat_x = logits.reshape(-1)          # keep native dtype; cast in-kernel
    flat_y = label.reshape(-1)

    # Hard {0,1} labels are exact in bf16; halves the label HBM stream.
    # (For soft labels pass compact_labels=False or feed bf16/int8 labels.)
    if compact_labels and flat_y.dtype == jnp.float32:
        flat_y = flat_y.astype(jnp.bfloat16)

    # Fast path: no concatenate when already a multiple of 8*128 -> the
    # flatten/reshape below is a pure bitcast (no HBM relayout pass).
    pad = (-total) % (8 * LANES)
    if pad:
        flat_x = jnp.concatenate(
            [flat_x, jnp.full((pad,), _PAD_LOGIT, flat_x.dtype)])
        flat_y = jnp.concatenate(
            [flat_y, jnp.full((pad,), _PAD_LABEL, flat_y.dtype)])

    m_rows = (total + pad) // LANES      # always a multiple of 8
    x2 = flat_x.reshape(m_rows, LANES)
    y2 = flat_y.reshape(m_rows, LANES)

    # Block-height selection: big blocks to amortize per-step overhead, but
    # bounded so (double-buffered inputs + elementwise temporaries) stays
    # inside the explicit VMEM budget (v7x has only 64 MiB physical VMEM).
    itemsize_x = jnp.dtype(x2.dtype).itemsize
    itemsize_y = jnp.dtype(y2.dtype).itemsize
    bytes_per_row = LANES * (2 * (itemsize_x + itemsize_y) + _TEMP_SLOTS * 4)
    cap_rows = max(8, ((_VMEM_BUDGET - (2 << 20)) // bytes_per_row) // 8 * 8)

    eff_rows = max(8, (min(int(tile_rows), m_rows, cap_rows) // 8) * 8)
    # v7x has 2 TensorCores: make sure the parallel axis has >=2 blocks.
    if m_rows >= 16 and pl.cdiv(m_rows, eff_rows) == 1:
        eff_rows = max(8, ((pl.cdiv(m_rows, 2) + 7) // 8) * 8)
    n_blocks = pl.cdiv(m_rows, eff_rows)

    # Wider partial accumulator when the block height allows it (more ILP).
    part_rows = 64 if eff_rows % 64 == 0 else 8

    vmem_limit = int(min(_VMEM_BUDGET,
                         max(32 << 20, eff_rows * bytes_per_row + (2 << 20))))

    kernel = functools.partial(
        _focal_partial_sum_kernel,
        alpha=float(alpha), gamma=float(gamma),
        tile_rows=eff_rows, part_rows=part_rows, m_rows=m_rows)

    in_spec = pl.BlockSpec((eff_rows, LANES), lambda i: (i, 0))

    partial_sums = pl.pallas_call(
        kernel,
        out_shape=jax.ShapeDtypeStruct((n_blocks * part_rows, LANES),
                                       jnp.float32),
        grid_spec=pltpu.PrefetchScalarGridSpec(
            num_scalar_prefetch=0,
            grid=(n_blocks,),
            in_specs=[in_spec, in_spec],
            out_specs=pl.BlockSpec((part_rows, LANES), lambda i: (i, 0)),
        ),
        compiler_params=pltpu.CompilerParams(
            dimension_semantics=("parallel",),
            vmem_limit_bytes=vmem_limit),
    )(x2, y2)

    total_sum = jnp.sum(partial_sums)
    if reduction == "mean":
        return total_sum / jnp.float32(total)
    if reduction == "sum":
        return total_sum
    # TODO(synk): reduction='none' (elementwise loss output) not implemented.
    raise NotImplementedError("reduction='none' not supported by this kernel")


def _reference_focal_loss(logits, label, alpha=0.25, gamma=2.0):
    x = logits.astype(jnp.float32)
    y = label.astype(jnp.float32)
    probs = jax.nn.sigmoid(x)
    coeff = -(jnp.abs(y - probs) ** gamma)
    log_probs = jax.nn.log_sigmoid(x)
    log_1_probs = jax.nn.log_sigmoid(-x)
    ce = alpha * y * log_probs + (1.0 - alpha) * (1.0 - y) * log_1_probs
    return jnp.mean(ce * coeff)


if __name__ == "__main__":
    key = jax.random.PRNGKey(0)
    k1, k2 = jax.random.split(key)

    # NCHW-shaped inputs, same convention as the PyTorch module.  Labels are
    # hard {0,1} targets fed as bf16 (exact) so the kernel streams 2 B/label.
    N, C, H, W = 2, 4, 16, 16
    logits = jax.random.normal(k1, (N, C, H, W), dtype=jnp.float32)
    label = jax.random.bernoulli(k2, 0.5, (N, C, H, W)).astype(jnp.bfloat16)

    loss = focal_loss_v2(logits, label, alpha=0.25, gamma=2.0,
                         reduction="mean")
    loss = jax.block_until_ready(loss)

    ref = _reference_focal_loss(logits, label, alpha=0.25, gamma=2.0)
    assert jnp.allclose(loss, ref, rtol=1e-4, atol=1e-6), (loss, ref)

    print("KERNEL_OK")
</pallas_src>

<mosaic_0001>
module attributes {stable_mosaic.version = 11 : i64} {
  func.func @_focal_partial_sum_kernel(%arg0: i32, %arg1: memref<8x128xf32, #tpu.memory_space<vmem>>, %arg2: memref<8x128xbf16, #tpu.memory_space<vmem>>, %arg3: memref<8x128xf32, #tpu.memory_space<vmem>>) attributes {dimension_semantics = [#tpu.dimension_semantics<parallel>], iteration_bounds = array<i64: 2>, scalar_prefetch = 0 : i64, scratch_operands = 0 : i64, tpu.core_type = #tpu.core_type<tc>, window_params = [{transform_indices = @transform_0, window_bounds = array<i64: 8, 128>}, {transform_indices = @transform_1, window_bounds = array<i64: 8, 128>}, {transform_indices = @transform_2, window_bounds = array<i64: 8, 128>}]} {
    %c0 = arith.constant 0 : index
    %c0_0 = arith.constant 0 : index
    %0 = vector.load %arg1[%c0, %c0_0] : memref<8x128xf32, #tpu.memory_space<vmem>>, vector<8x128xf32>
    %c0_1 = arith.constant 0 : index
    %c0_2 = arith.constant 0 : index
    %1 = vector.load %arg2[%c0_1, %c0_2] : memref<8x128xbf16, #tpu.memory_space<vmem>>, vector<8x128xbf16>
    %2 = arith.extf %1 : vector<8x128xbf16> to vector<8x128xf32>
    %3 = math.absf %0 : vector<8x128xf32>
    %cst = arith.constant 0.000000e+00 : f32
    %4 = vector.broadcast %cst : f32 to vector<8x128xf32>
    %5 = arith.subf %4, %3 : vector<8x128xf32>
    %6 = math.exp %5 : vector<8x128xf32>
    %7 = math.log1p %6 : vector<8x128xf32>
    %cst_3 = arith.constant 0.000000e+00 : f32
    %8 = vector.broadcast %cst_3 : f32 to vector<8x128xf32>
    %9 = arith.minimumf %0, %8 : vector<8x128xf32>
    %10 = arith.subf %9, %7 : vector<8x128xf32>
    %cst_4 = arith.constant 0.000000e+00 : f32
    %11 = vector.broadcast %cst_4 : f32 to vector<8x128xf32>
    %12 = arith.subf %11, %0 : vector<8x128xf32>
    %cst_5 = arith.constant 0.000000e+00 : f32
    %13 = vector.broadcast %cst_5 : f32 to vector<8x128xf32>
    %14 = arith.minimumf %12, %13 : vector<8x128xf32>
    %15 = arith.subf %14, %7 : vector<8x128xf32>
    %16 = math.exp %10 : vector<8x128xf32>
    %17 = arith.subf %2, %16 : vector<8x128xf32>
    %18 = math.absf %17 : vector<8x128xf32>
    %19 = arith.mulf %18, %18 : vector<8x128xf32>
    %cst_6 = arith.constant 0.000000e+00 : f32
    %20 = vector.broadcast %cst_6 : f32 to vector<8x128xf32>
    %21 = arith.subf %20, %19 : vector<8x128xf32>
    %cst_7 = arith.constant 2.500000e-01 : f32
    %22 = vector.broadcast %cst_7 : f32 to vector<8x128xf32>
    %23 = arith.mulf %22, %2 : vector<8x128xf32>
    %24 = arith.mulf %23, %10 : vector<8x128xf32>
    %cst_8 = arith.constant 1.000000e+00 : f32
    %25 = vector.broadcast %cst_8 : f32 to vector<8x128xf32>
    %26 = arith.subf %25, %2 : vector<8x128xf32>
    %cst_9 = arith.constant 7.500000e-01 : f32
    %27 = vector.broadcast %cst_9 : f32 to vector<8x128xf32>
    %28 = arith.mulf %27, %26 : vector<8x128xf32>
    %29 = arith.mulf %28, %15 : vector<8x128xf32>
    %30 = arith.addf %24, %29 : vector<8x128xf32>
    %31 = arith.mulf %30, %21 : vector<8x128xf32>
    %32 = vector.shape_cast %31 : vector<8x128xf32> to vector<1x8x128xf32>
    %cst_10 = arith.constant dense<0.000000e+00> : vector<8x128xf32>
    %33 = vector.multi_reduction <add>, %32, %cst_10 [0] : vector<1x8x128xf32> to vector<8x128xf32>
    %c0_11 = arith.constant 0 : index
    %c0_12 = arith.constant 0 : index
    %34 = vector.load %arg3[%c0_11, %c0_12] : memref<8x128xf32, #tpu.memory_space<vmem>>, vector<8x128xf32>
    tpu.vector_store %arg3[%c0_11, %c0_12], %33 {strides = array<i32>} : memref<8x128xf32, #tpu.memory_space<vmem>>, vector<8x128xf32>,
    return
  }
  func.func @transform_0(%arg0: i32) -> (i32, i32) {
    %c0_i32 = arith.constant 0 : i32
    %c0_i32_0 = arith.constant 0 : i32
    return %arg0, %c0_i32 : i32, i32
  }
  func.func @transform_1(%arg0: i32) -> (i32, i32) {
    %c0_i32 = arith.constant 0 : i32
    %c0_i32_0 = arith.constant 0 : i32
    return %arg0, %c0_i32 : i32, i32
  }
  func.func @transform_2(%arg0: i32) -> (i32, i32) {
    %c0_i32 = arith.constant 0 : i32
    %c0_i32_0 = arith.constant 0 : i32
    return %arg0, %c0_i32 : i32, i32
  }
}

</mosaic_0001>

<llo_original>
// kernel: tpu_custom_call.1
$region0: #{tpu_custom_call.1}
  #allocation0 [shape = 'u32[]', space=smem, size = 0x4, offset = 0x4, fixed_abs, tag = 'smem constant byte address 0x4 - core index']
  #allocation1 [shape = 'u32[72,128]{1,0:T(1,128)}', space=vmem, size = 0x9000, scoped, tag = 'internal scratch']
  %s0 = inlined_call_operand.hbm [shape: f32[16,128], index: 0, kind: input, shape index: {}]
  %s1 = inlined_call_operand.hbm [shape: bf16[16,128], index: 1, kind: input, shape index: {}]
  %s2 = inlined_call_operand.hbm [shape: f32[16,128], index: 2, kind: output, shape index: {}]
  %s3 = sld [smem:[#allocation0]]
  $region49: #{tpu_custom_call.1} parent=0
    _
  %s5 = ssub.s32 1, %s3
  %s6 = scalar_select 0, %s5, %s3
  $region1: #{tpu_custom_call.1} parent=0
    #allocation2 [shape = 'u8[8192]{0}', space=vmem, size = 0x2000, scoped, tag = 'input window, operand 0']
    #allocation3 [shape = 's32[2]{0}', space=sflag, size = 0x8, scoped, tag = 'scoped memory for tpu_custom_call.1']
    #allocation4 [shape = 's32[2]{0}', space=sflag, size = 0x8, scoped, tag = 'scoped memory for tpu_custom_call.1']
    #allocation5 [shape = 'u8[4096]{0}', space=vmem, size = 0x1000, scoped, tag = 'input window, operand 1']
    #allocation6 [shape = 's32[2]{0}', space=sflag, size = 0x8, scoped, tag = 'scoped memory for tpu_custom_call.1']
    #allocation7 [shape = 'u8[8192]{0}', space=vmem, size = 0x2000, scoped, tag = 'output window, operand 0']
    %7 = vsyncpa [#allocation3], 0
    %s8 = scalar_lea.sflag [#allocation3], 1
    %9 = vsyncpa %s8, 0
    %10 = vsyncpa [#allocation6], 0
    %s11 = scalar_lea.sflag [#allocation6], 1
    %12 = vsyncpa %s11, 0
    %13 = vsyncpa [#allocation4], 0
    %s14 = scalar_lea.sflag [#allocation4], 1
    %15 = vsyncpa %s14, 0
    loop: start=0, step=1, limit=4
    $region2: #{tpu_custom_call.1} parent=1 // loop_pre_header
      _
    $region3: #{tpu_custom_call.1} parent=1 // loop_header
      %s17 = sphi 0, %s21
      %p18 = scmp.ge.s32.totalorder %s17, 4
      %s27 = sphi 0, %s29
      %s30 = sphi 0, %s27
      %s31 = sphi 0, %s30
      %s47 = sphi 0, %s31
      %s53 = sphi 0, %s55
      %s56 = sphi 0, %s53
      %s57 = sphi 0, %s56
      %s73 = sphi 0, %s57
      %s79 = sphi 0, %s81
      %s82 = sphi 0, %s79
      %s83 = sphi 0, %s82
      %s99 = sphi 0, %s83
    $region4: #{tpu_custom_call.1} parent=1 // loop_header_branch
      %20 = sbr.rel (%p18) target = $region8
    $region5: #{tpu_custom_call.1} parent=1 // loop_body
      %s22 = ssub.s32 %s17, 1
      %s23 = ssub.s32 %s17, 2
      %s24 = sadd.s32 %s17, 1
      %s25 = ssub.s32 %s17, %s24
      %p26 = scmp.eq.s32.totalorder %s25, 0
      %s28 = sadd.s32 %s27, 1
      %s29 = scalar_select %p26, %s27, %s28
      %p32 = pneg %p26
      %p33 = scmp.eq.s32.totalorder %s17, 1
      %p34 = por %p32, %p33
      %p35 = scmp.ne.s32.totalorder %s27, %s30
      %p36 = scmp.eq.s32.totalorder %s17, 0
      %p37 = por %p35, %p36
      %p38 = scmp.ne.s32.totalorder %s27, %s30
      %p39 = scmp.eq.s32.totalorder %s22, 1
      %p40 = por %p38, %p39
      %p41 = scmp.ne.s32.totalorder %s30, %s31
      %p42 = scmp.eq.s32.totalorder %s22, 0
      %p43 = por %p41, %p42
      %p44 = scmp.ne.s32.totalorder %s30, %s31
      %p45 = scmp.eq.s32.totalorder %s23, 1
      %p46 = por %p44, %p45
      %p48 = scmp.ne.s32.totalorder %s31, %s47
      %p49 = scmp.eq.s32.totalorder %s23, 0
      %p50 = por %p48, %p49
      %s51 = ssub.s32 %s17, %s24
      %p52 = scmp.eq.s32.totalorder %s51, 0
      %s54 = sadd.s32 %s53, 1
      %s55 = scalar_select %p52, %s53, %s54
      %p58 = pneg %p52
      %p59 = scmp.eq.s32.totalorder %s17, 1
      %p60 = por %p58, %p59
      %p61 = scmp.ne.s32.totalorder %s53, %s56
      %p62 = scmp.eq.s32.totalorder %s17, 0
      %p63 = por %p61, %p62
      %p64 = scmp.ne.s32.totalorder %s53, %s56
      %p65 = scmp.eq.s32.totalorder %s22, 1
      %p66 = por %p64, %p65
      %p67 = scmp.ne.s32.totalorder %s56, %s57
      %p68 = scmp.eq.s32.totalorder %s22, 0
      %p69 = por %p67, %p68
      %p70 = scmp.ne.s32.totalorder %s56, %s57
      %p71 = scmp.eq.s32.totalorder %s23, 1
      %p72 = por %p70, %p71
      %p74 = scmp.ne.s32.totalorder %s57, %s73
      %p75 = scmp.eq.s32.totalorder %s23, 0
      %p76 = por %p74, %p75
      %s77 = ssub.s32 %s17, %s24
      %p78 = scmp.eq.s32.totalorder %s77, 0
      %s80 = sadd.s32 %s79, 1
      %s81 = scalar_select %p78, %s79, %s80
      %p84 = pneg %p78
      %p85 = scmp.eq.s32.totalorder %s17, 1
      %p86 = por %p84, %p85
      %p87 = scmp.ne.s32.totalorder %s79, %s82
      %p88 = scmp.eq.s32.totalorder %s17, 0
      %p89 = por %p87, %p88
      %p90 = scmp.ne.s32.totalorder %s79, %s82
      %p91 = scmp.eq.s32.totalorder %s22, 1
      %p92 = por %p90, %p91
      %p93 = scmp.ne.s32.totalorder %s82, %s83
      %p94 = scmp.eq.s32.totalorder %s22, 0
      %p95 = por %p93, %p94
      %p96 = scmp.ne.s32.totalorder %s82, %s83
      %p97 = scmp.eq.s32.totalorder %s23, 1
      %p98 = por %p96, %p97
      %p100 = scmp.ne.s32.totalorder %s83, %s99
      %p101 = scmp.eq.s32.totalorder %s23, 0
      %p102 = por %p100, %p101
      %p103 = scmp.le.s32.totalorder 1, %s17
      %p104 = scmp.lt.s32.totalorder %s17, 3
      %p105 = pnand %p103, %p104
      %p106 = pneg %p105
      // Predicated region
      $region9: #{tpu_custom_call.1} parent=5 // pred_check
        _
      $region10: #{tpu_custom_call.1} parent=5 // pred_check_branch
        %108 = sbr.rel (%p105) target = $region12
      $region11: #{tpu_custom_call.1} parent=5 // pred_region
        %s109 = ssub.s32 %s17, 1
      $region12: #{tpu_custom_call.1} parent=5 // pred_fallthru
        _
      %p110 = scmp.lt.s32.totalorder %s17, 2
      // Predicated region
      $region13: #{tpu_custom_call.1} parent=5 // pred_check
        %p111 = pneg %p110
      $region14: #{tpu_custom_call.1} parent=5 // pred_check_branch
        %113 = sbr.rel (%p111) target = $region16
      $region15: #{tpu_custom_call.1} parent=5 // pred_region
        // Predicated region
        $region17: #{tpu_custom_call.1} parent=15 // pred_check
          %p114 = pneg %p37
        $region18: #{tpu_custom_call.1} parent=15 // pred_check_branch
          %116 = sbr.rel (%p114) target = $region20
        $region19: #{tpu_custom_call.1} parent=15 // pred_region
          %s117 = sand.u32 %s27, 1
          %s118 = scalar_lea.sflag [#allocation3], %s117
          %s119 = sand.u32 %s27, 1
          %s120 = smul.addr %s119, 8
          %s121 = scalar_lea.vmem [#allocation2], %s120
          %123 = vsyncadd %s118, 0
          %s124 = smul.addr %s17, 8
          %s125 = scalar_lea.hbm %s0, %s124
          %s127 = sshll.u32 %s125, 4
          %s128 = int_to_ptr.hbm [resolvable:$true] %s127
          %s129 = sshll.u32 %s121, 4
          %s130 = int_to_ptr.vmem [resolvable:$true] %s129
          %132 = dma.hbm_to_vmem [thread:$0]  %s128, 128, %s130, %s118
        $region20: #{tpu_custom_call.1} parent=15 // pred_fallthru
          _
        // Predicated region
        $region21: #{tpu_custom_call.1} parent=15 // pred_check
          %p133 = pneg %p63
        $region22: #{tpu_custom_call.1} parent=15 // pred_check_branch
          %135 = sbr.rel (%p133) target = $region24
        $region23: #{tpu_custom_call.1} parent=15 // pred_region
          %s136 = sand.u32 %s53, 1
          %s137 = scalar_lea.sflag [#allocation6], %s136
          %s138 = sand.u32 %s53, 1
          %s139 = smul.addr %s138, 4
          %s140 = scalar_lea.vmem [#allocation5], %s139
          %142 = vsyncadd %s137, 0
          %s143 = smul.addr %s17, 4
          %s144 = scalar_lea.hbm %s1, %s143
          %s146 = sshll.u32 %s144, 4
          %s147 = int_to_ptr.hbm [resolvable:$true] %s146
          %s148 = sshll.u32 %s140, 4
          %s149 = int_to_ptr.vmem [resolvable:$true] %s148
          %151 = dma.hbm_to_vmem [thread:$0]  %s147, 64, %s149, %s137
        $region24: #{tpu_custom_call.1} parent=15 // pred_fallthru
          _
      $region16: #{tpu_custom_call.1} parent=5 // pred_fallthru
        _
      %p152 = scmp.le.s32.totalorder 1, %s17
      %p153 = scmp.lt.s32.totalorder %s17, 3
      %p154 = pnand %p152, %p153
      %p155 = pneg %p154
      // Predicated region
      $region25: #{tpu_custom_call.1} parent=5 // pred_check
        _
      $region26: #{tpu_custom_call.1} parent=5 // pred_check_branch
        %157 = sbr.rel (%p154) target = $region28
      $region27: #{tpu_custom_call.1} parent=5 // pred_region
        %s158 = ssub.s32 %s17, 1
        %s159 = sand.u32 %s30, 1
        %s160 = scalar_lea.sflag [#allocation3], %s159
        %s161 = sand.u32 %s30, 1
        %s162 = smul.addr %s161, 8
        %s163 = scalar_lea.vmem [#allocation2], %s162
        // Predicated region
        $region29: #{tpu_custom_call.1} parent=27 // pred_check
          %p164 = pneg %p43
        $region30: #{tpu_custom_call.1} parent=27 // pred_check_branch
          %166 = sbr.rel (%p164) target = $region32
        $region31: #{tpu_custom_call.1} parent=27 // pred_region
          %168 = dma.done %s160, 128
        $region32: #{tpu_custom_call.1} parent=27 // pred_fallthru
          _
        %s169 = sand.u32 %s56, 1
        %s170 = scalar_lea.sflag [#allocation6], %s169
        %s171 = sand.u32 %s56, 1
        %s172 = smul.addr %s171, 4
        %s173 = scalar_lea.vmem [#allocation5], %s172
        // Predicated region
        $region33: #{tpu_custom_call.1} parent=27 // pred_check
          %p174 = pneg %p69
        $region34: #{tpu_custom_call.1} parent=27 // pred_check_branch
          %176 = sbr.rel (%p174) target = $region36
        $region35: #{tpu_custom_call.1} parent=27 // pred_region
          %178 = dma.done %s170, 64
        $region36: #{tpu_custom_call.1} parent=27 // pred_fallthru
          _
        %s179 = sand.u32 %s30, 1
        %s180 = scalar_lea.sflag [#allocation3], %s179
        %s181 = sand.u32 %s30, 1
        %s182 = smul.addr %s181, 8
        %s183 = scalar_lea.vmem [#allocation2], %s182
        %p184 = pneg %p43
        %p185 = pneg %p40
        %s186 = sand.u32 %s56, 1
        %s187 = scalar_lea.sflag [#allocation6], %s186
        %s188 = sand.u32 %s56, 1
        %s189 = smul.addr %s188, 4
        %s190 = scalar_lea.vmem [#allocation5], %s189
        %p191 = pneg %p69
        %p192 = pneg %p66
        %p193 = pneg %p95
        %p194 = pneg %p92
        %s195 = sand.u32 %s82, 1
        %s196 = scalar_lea.sflag [#allocation4], %s195
        %s197 = sand.u32 %s82, 1
        %s198 = smul.addr %s197, 8
        %s199 = scalar_lea.vmem [#allocation7], %s198
        %v200 = vld [vmem:[%s163] sm:$0xff]
        %v201 = vld [vmem:[%s173] sm:$0xf]
        %v202 = vunpack.c.l.bf16 %v201
        %v203 = vand.u32 2147483647, %v200
        %v204 = vsub.f32 0.0, %v203
        %v205 = vmul.f32 %v204, 1.442695
        %v206 = vpow.pop %v205
        %v207 = vadd.f32 %v206, 1.0
        %v208 = vlog2.pop %v207
        %v209 = vmul.f32 %v208, 0.6931472
        %v210 = vmul.f32 -0.5, %v206
        %v211 = vadd.f32 %v210, 1.0
        %v212 = vmul.f32 %v211, %v206
        %v213 = vand.u32 2147483647, %v206
        %vm214 = vcmp.lt.f32.partialorder %v213, 0.0004427343
        %v215 = vsel %vm214, %v212, %v209
        %v216 = vmin.f32 %v200, 0.0
        %v217 = vsub.f32 %v216, %v215
        %v218 = vsub.f32 0.0, %v200
        %v219 = vmin.f32 %v218, 0.0
        %v220 = vsub.f32 %v219, %v215
        %v221 = vmul.f32 %v217, 1.442695
        %v222 = vpow.pop %v221
        %v223 = vsub.f32 %v202, %v222
        %v224 = vand.u32 2147483647, %v223
        %v225 = vmul.f32 %v224, %v224
        %v226 = vsub.f32 0.0, %v225
        %v227 = vmul.f32 %v202, 0.25
        %v228 = vmul.f32 %v227, %v217
        %v229 = vsub.f32 1.0, %v202
        %v230 = vmul.f32 %v229, 0.75
        %v231 = vmul.f32 %v230, %v220
        %v232 = vadd.f32 %v228, %v231
        %v233 = vmul.f32 %v232, %v226
        %v234 = vadd.f32 %v233, 0.0
        %235 = vst [vmem:[%s199] sm:$0xff] %v234
        %s236 = sand.u32 %s82, 1
        %s237 = scalar_lea.sflag [#allocation4], %s236
        %s238 = sand.u32 %s82, 1
        %s239 = smul.addr %s238, 8
        %s240 = scalar_lea.vmem [#allocation7], %s239
        // Predicated region
        $region37: #{tpu_custom_call.1} parent=27 // pred_check
          %p241 = pneg %p92
        $region38: #{tpu_custom_call.1} parent=27 // pred_check_branch
          %243 = sbr.rel (%p241) target = $region40
        $region39: #{tpu_custom_call.1} parent=27 // pred_region
          %245 = vsyncadd %s237, 0
          %s246 = smul.addr %s22, 8
          %s247 = scalar_lea.hbm %s2, %s246
          %s249 = sshll.u32 %s240, 4
          %s250 = int_to_ptr.vmem [resolvable:$true] %s249
          %s251 = sshll.u32 %s247, 4
          %s252 = int_to_ptr.hbm [resolvable:$true] %s251
          %254 = dma.vmem_to_hbm [thread:$0]  %s250, 128, %s252, %s237
        $region40: #{tpu_custom_call.1} parent=27 // pred_fallthru
          _
      $region28: #{tpu_custom_call.1} parent=5 // pred_fallthru
        _
      %p255 = scmp.le.s32.totalorder 2, %s17
      // Predicated region
      $region41: #{tpu_custom_call.1} parent=5 // pred_check
        %p256 = pneg %p255
      $region42: #{tpu_custom_call.1} parent=5 // pred_check_branch
        %258 = sbr.rel (%p256) target = $region44
      $region43: #{tpu_custom_call.1} parent=5 // pred_region
        %s259 = ssub.s32 %s17, 2
        // Predicated region
        $region45: #{tpu_custom_call.1} parent=43 // pred_check
          %p260 = pneg %p98
        $region46: #{tpu_custom_call.1} parent=43 // pred_check_branch
          %262 = sbr.rel (%p260) target = $region48
        $region47: #{tpu_custom_call.1} parent=43 // pred_region
          %s263 = sand.u32 %s83, 1
          %s264 = scalar_lea.sflag [#allocation4], %s263
          %s265 = sand.u32 %s83, 1
          %s266 = smul.addr %s265, 8
          %s267 = scalar_lea.vmem [#allocation7], %s266
          %269 = dma.done %s264, 128
        $region48: #{tpu_custom_call.1} parent=43 // pred_fallthru
          _
      $region44: #{tpu_custom_call.1} parent=5 // pred_fallthru
        _
    $region6: #{tpu_custom_call.1} parent=1 // loop_footer
      %s21 = sadd.s32 1, %s17
    $region7: #{tpu_custom_call.1} parent=1 // loop_footer_branch
      %16 = sbr.rel target = $region3
    $region8: #{tpu_custom_call.1} parent=1 // loop_exit
      _
    %270 = vsyncpa [#allocation3], 1
    %s271 = scalar_lea.sflag [#allocation3], 1
    %272 = vsyncpa %s271, 1
    %273 = vsyncpa [#allocation6], 1
    %s274 = scalar_lea.sflag [#allocation6], 1
    %275 = vsyncpa %s274, 1
    %276 = vsyncpa [#allocation4], 1
    %s277 = scalar_lea.sflag [#allocation4], 1
    %278 = vsyncpa %s277, 1

</llo_original>
